<compile_context>
chip_gen: v6e
topology: v6e:2x2x1
jax: 0.10.0
libtpu: 0.0.40
codegen_flags: <defaults>
</compile_context>

<pallas_src>
import functools

import jax
import jax.numpy as jnp
from jax.experimental import pallas as pl
from jax.experimental.pallas import tpu as pltpu

_LANES = 128


def _cdiv(a, b):
    return (a + b - 1) // b


def _round_up(a, b):
    return _cdiv(a, b) * b


def _vmem_capacity_bytes():
    try:
        return int(pltpu.get_tpu_info().vmem_capacity_bytes)
    except Exception:
        return 64 * 1024 * 1024  # conservative (v7x per-core VMEM)


def _labels_to_column(labels_row):
    """(1, T) lane-dense int32 labels -> (T, 1) sublane column.

    Per-128-lane diagonal extraction (sublane-broadcast + select + lane
    reduce): only plain VPU/XLU ops, so it always lowers, and it costs
    ~0.1 cycles/sample — negligible in this HBM-bound kernel.
    """
    t = labels_row.shape[1]
    di = jax.lax.broadcasted_iota(jnp.int32, (_LANES, _LANES), 0)
    dj = jax.lax.broadcasted_iota(jnp.int32, (_LANES, _LANES), 1)
    diag = di == dj
    cols = []
    for k in range(t // _LANES):
        chunk = labels_row[:, k * _LANES:(k + 1) * _LANES]      # (1, 128)
        bcast = jnp.broadcast_to(chunk, (_LANES, _LANES))        # sublane bcast
        cols.append(jnp.sum(jnp.where(diag, bcast, 0), axis=1, keepdims=True))
    return jnp.concatenate(cols, axis=0)                         # (T, 1)


def _focal_loss_kernel(logits_ref, labels_ref, alpha_ref, out_ref, *,
                       gamma, n_valid, tile_n, has_alpha):
    """One row-major (TILE_N, C) block: samples on sublanes, classes on lanes."""
    blk = pl.program_id(0)
    logits = logits_ref[...].astype(jnp.float32)                 # (T, C)
    t, c = logits.shape

    labels_col = _labels_to_column(labels_ref[...])              # (T, 1) int32

    # Numerically-stable log-softmax over the class (lane) axis.
    m = jnp.max(logits, axis=-1, keepdims=True)                  # (T, 1)
    shifted = logits - m
    sumexp = jnp.sum(jnp.exp(shifted), axis=-1, keepdims=True)   # (T, 1)

    # Gather the label class via a one-hot lane mask (no dynamic gather on TPU).
    cls = jax.lax.broadcasted_iota(jnp.int32, (t, c), 1)
    onehot = cls == labels_col                                   # (T, C) bool
    shifted_at = jnp.sum(jnp.where(onehot, shifted, 0.0),
                         axis=-1, keepdims=True)                 # (T, 1)

    logpt = shifted_at - jnp.log(sumexp)                         # (T, 1) log p_t
    pt = jnp.exp(logpt)                                          # pre-alpha, matches reference

    if has_alpha:
        at = jnp.sum(jnp.where(onehot, alpha_ref[...], 0.0),
                     axis=-1, keepdims=True)                     # alpha[label]
        logpt = logpt * at

    if gamma == 0.0:
        loss = -logpt                                            # also avoids 0**0 issues
    elif float(gamma).is_integer() and 0.0 < gamma <= 8.0:
        omp = 1.0 - pt                                           # integer gamma: VPU multiplies
        mod = omp
        for _ in range(int(gamma) - 1):
            mod = mod * omp
        loss = -(mod * logpt)
    else:
        # Clamp keeps (1-pt) >= 0 so the EUP pow never sees a tiny negative.
        loss = -(jnp.maximum(1.0 - pt, 0.0) ** gamma * logpt)

    # Mask samples past the end of the array (ragged last block reads garbage).
    row = jax.lax.broadcasted_iota(jnp.int32, (t, 1), 0)
    valid = (blk * tile_n + row) < n_valid
    loss = jnp.where(valid, loss, 0.0)

    partial = jnp.sum(loss)                                      # scalar per block
    lane = jax.lax.broadcasted_iota(jnp.int32, (1, _LANES), 1)
    out_ref[...] = jnp.where(lane == 0, partial, 0.0)            # (1, 128) store


def _auto_tile_n(n, c, itemsize, vmem_cap):
    """Byte-targeted sample tile: ~2-4 MiB logits blocks, multiple of 128."""
    target = 4 * 1024 * 1024 if vmem_cap >= 128 * 1024 * 1024 else 2 * 1024 * 1024
    tile_n = target // max(c * itemsize, 1)
    tile_n = max(_LANES, min(4096, (tile_n // _LANES) * _LANES))
    # Keep >= 2 blocks when there is enough work so both v7x TensorCores run.
    tile_n = min(tile_n, max(_LANES, _round_up(_cdiv(n, 2), _LANES)))
    return tile_n


def focal_loss(logits, labels, *, gamma=0.0, alpha=None, size_average=True,
               tile_n=None):
    """JAX/Pallas equivalent of FocalLoss(gamma, alpha, size_average)(out, y)."""
    n, c = logits.shape
    labels2d = labels.reshape(1, -1).astype(jnp.int32)           # lane-dense, 4 B/sample

    has_alpha = alpha is not None
    if not has_alpha:
        alpha2d = jnp.zeros((1, 1), jnp.float32)                 # dummy, never read
    else:
        if isinstance(alpha, (float, int)):
            if c != 2:
                raise ValueError("scalar alpha builds [alpha, 1-alpha]; requires C == 2")
            alpha_vec = jnp.array([alpha, 1.0 - alpha], jnp.float32)
        else:
            alpha_vec = jnp.asarray(alpha, jnp.float32).reshape(-1)
            if alpha_vec.shape[0] != c:
                raise ValueError("alpha must have one entry per class")
        alpha2d = alpha_vec.reshape(1, c)

    itemsize = jnp.dtype(logits.dtype).itemsize
    vmem_cap = _vmem_capacity_bytes()
    if tile_n is None:
        tile_n = _auto_tile_n(n, c, itemsize, vmem_cap)
    else:
        tile_n = max(_LANES, _round_up(int(tile_n), _LANES))
    num_blocks = _cdiv(n, tile_n)

    kernel = functools.partial(_focal_loss_kernel, gamma=float(gamma),
                               n_valid=n, tile_n=tile_n, has_alpha=has_alpha)

    partials = pl.pallas_call(
        kernel,
        out_shape=jax.ShapeDtypeStruct((1, _LANES * num_blocks), jnp.float32),
        grid=(num_blocks,),
        in_specs=[
            pl.BlockSpec((tile_n, c), lambda i: (i, 0)),         # logits (TILE_N, C)
            pl.BlockSpec((1, tile_n), lambda i: (0, i)),         # labels (1, TILE_N)
            pl.BlockSpec(alpha2d.shape, lambda i: (0, 0)),       # alpha (1, C) / dummy
        ],
        out_specs=pl.BlockSpec((1, _LANES), lambda i: (0, i)),   # per-block partial
        compiler_params=pltpu.CompilerParams(
            dimension_semantics=("parallel",),
            vmem_limit_bytes=int(min(vmem_cap // 2, 64 * 1024 * 1024)),
        ),
    )(logits, labels2d, alpha2d)

    total = jnp.sum(partials)                                    # non-lane-0 entries are 0
    return total / n if size_average else total


def _focal_loss_ref(logits, labels, *, gamma, alpha, size_average):
    """Pure-JAX reference mirroring the PyTorch forward."""
    logsm = jax.nn.log_softmax(logits.astype(jnp.float32), axis=1)
    logpt = jnp.take_along_axis(logsm, labels.reshape(-1, 1), axis=1).reshape(-1)
    pt = jnp.exp(logpt)
    if alpha is not None:
        at = jnp.asarray(alpha, jnp.float32)[labels]
        logpt = logpt * at
    loss = -1.0 * (1.0 - pt) ** gamma * logpt
    return loss.mean() if size_average else loss.sum()


if __name__ == "__main__":
    key = jax.random.PRNGKey(0)
    k1, k2, k3, k4 = jax.random.split(key, 4)

    # Case 1: small shapes consistent with the module (N samples, C classes),
    # gamma=2 with a per-class alpha list, mean reduction.
    N, C = 8, 16
    logits = jax.random.normal(k1, (N, C), dtype=jnp.float32)
    labels = jax.random.randint(k2, (N,), 0, C, dtype=jnp.int32)
    gamma = 2.0
    alpha = [0.25 + 0.05 * i for i in range(C)]

    loss = jax.block_until_ready(
        focal_loss(logits, labels, gamma=gamma, alpha=alpha, size_average=True))
    ref = _focal_loss_ref(logits, labels, gamma=gamma, alpha=alpha,
                          size_average=True)
    assert jnp.allclose(loss, ref, rtol=1e-4, atol=1e-5), (loss, ref)

    # Case 2: module defaults (gamma=0, no alpha) with sum reduction.
    loss0 = jax.block_until_ready(
        focal_loss(logits, labels, gamma=0.0, alpha=None, size_average=False))
    ref0 = _focal_loss_ref(logits, labels, gamma=0.0, alpha=None,
                           size_average=False)
    assert jnp.allclose(loss0, ref0, rtol=1e-4, atol=1e-5), (loss0, ref0)

    # Case 3: multi-block grid + ragged last block (N not a tile multiple),
    # scalar alpha with C == 2.
    N2, C2 = 300, 2
    logits2 = jax.random.normal(k3, (N2, C2), dtype=jnp.float32)
    labels2 = jax.random.randint(k4, (N2,), 0, C2, dtype=jnp.int32)
    loss2 = jax.block_until_ready(
        focal_loss(logits2, labels2, gamma=2.0, alpha=0.25,
                   size_average=True, tile_n=128))
    ref2 = _focal_loss_ref(logits2, labels2, gamma=2.0,
                           alpha=jnp.array([0.25, 0.75], jnp.float32),
                           size_average=True)
    assert jnp.allclose(loss2, ref2, rtol=1e-4, atol=1e-5), (loss2, ref2)

    # Case 4: bf16 logits in HBM (half the DMA bytes); kernel computes in f32.
    logits_bf16 = logits.astype(jnp.bfloat16)
    loss_b = jax.block_until_ready(
        focal_loss(logits_bf16, labels, gamma=gamma, alpha=alpha,
                   size_average=True))
    ref_b = _focal_loss_ref(logits_bf16.astype(jnp.float32), labels,
                            gamma=gamma, alpha=alpha, size_average=True)
    assert jnp.allclose(loss_b, ref_b, rtol=1e-4, atol=1e-5), (loss_b, ref_b)

    print("KERNEL_OK")
</pallas_src>

<mosaic_0001>
module attributes {stable_mosaic.version = 11 : i64} {
  func.func @_focal_loss_kernel(%arg0: i32, %arg1: memref<128x16xf32, #tpu.memory_space<vmem>>, %arg2: memref<1x128xi32, #tpu.memory_space<vmem>>, %arg3: memref<1x16xf32, #tpu.memory_space<vmem>>, %arg4: memref<1x128xf32, #tpu.memory_space<vmem>>) attributes {dimension_semantics = [#tpu.dimension_semantics<parallel>], iteration_bounds = array<i64: 1>, scalar_prefetch = 0 : i64, scratch_operands = 0 : i64, tpu.core_type = #tpu.core_type<tc>, window_params = [{transform_indices = @transform_0, window_bounds = array<i64: 128, 16>}, {transform_indices = @transform_1, window_bounds = array<i64: 1, 128>}, {pipeline_mode = #tpu.pipeline_mode<synchronous>, transform_indices = @transform_2, window_bounds = array<i64: 1, 16>}, {transform_indices = @transform_3, window_bounds = array<i64: 1, 128>}]} {
    %c0 = arith.constant 0 : index
    %c0_0 = arith.constant 0 : index
    %0 = vector.load %arg1[%c0, %c0_0] : memref<128x16xf32, #tpu.memory_space<vmem>>, vector<128x16xf32>
    %c0_1 = arith.constant 0 : index
    %c0_2 = arith.constant 0 : index
    %1 = vector.load %arg2[%c0_1, %c0_2] : memref<1x128xi32, #tpu.memory_space<vmem>>, vector<1x128xi32>
    %2 = tpu.iota {dimensions = array<i32: 0>} : vector<128x128xi32>
    %3 = tpu.iota {dimensions = array<i32: 1>} : vector<128x128xi32>
    %4 = arith.cmpi eq, %2, %3 : vector<128x128xi32>
    %5 = vector.shape_cast %1 : vector<1x128xi32> to vector<1x128xi32>
    %6 = vector.broadcast %5 : vector<1x128xi32> to vector<128x128xi32>
    %c0_i32 = arith.constant 0 : i32
    %7 = vector.broadcast %c0_i32 : i32 to vector<128x128xi32>
    %8 = arith.select %4, %6, %7 : vector<128x128xi1>, vector<128x128xi32>
    %cst = arith.constant dense<0> : vector<128xi32>
    %9 = vector.multi_reduction <add>, %8, %cst [1] : vector<128x128xi32> to vector<128xi32>
    %10 = vector.shape_cast %9 : vector<128xi32> to vector<128x1xi32>
    %cst_3 = arith.constant dense<0xFF800000> : vector<128xf32>
    %11 = vector.multi_reduction <maximumf>, %0, %cst_3 [1] : vector<128x16xf32> to vector<128xf32>
    %12 = vector.shape_cast %11 : vector<128xf32> to vector<128x1xf32>
    %13 = vector.broadcast %12 : vector<128x1xf32> to vector<128x16xf32>
    %14 = arith.subf %0, %13 : vector<128x16xf32>
    %15 = math.exp %14 : vector<128x16xf32>
    %cst_4 = arith.constant dense<0.000000e+00> : vector<128xf32>
    %16 = vector.multi_reduction <add>, %15, %cst_4 [1] : vector<128x16xf32> to vector<128xf32>
    %17 = vector.shape_cast %16 : vector<128xf32> to vector<128x1xf32>
    %18 = tpu.iota {dimensions = array<i32: 1>} : vector<128x16xi32>
    %19 = vector.broadcast %10 : vector<128x1xi32> to vector<128x16xi32>
    %20 = arith.cmpi eq, %18, %19 : vector<128x16xi32>
    %cst_5 = arith.constant 0.000000e+00 : f32
    %21 = vector.broadcast %cst_5 : f32 to vector<128x16xf32>
    %22 = arith.select %20, %14, %21 : vector<128x16xi1>, vector<128x16xf32>
    %cst_6 = arith.constant dense<0.000000e+00> : vector<128xf32>
    %23 = vector.multi_reduction <add>, %22, %cst_6 [1] : vector<128x16xf32> to vector<128xf32>
    %24 = vector.shape_cast %23 : vector<128xf32> to vector<128x1xf32>
    %25 = math.log %17 : vector<128x1xf32>
    %26 = arith.subf %24, %25 : vector<128x1xf32>
    %27 = math.exp %26 : vector<128x1xf32>
    %c0_7 = arith.constant 0 : index
    %c0_8 = arith.constant 0 : index
    %28 = vector.load %arg3[%c0_7, %c0_8] : memref<1x16xf32, #tpu.memory_space<vmem>>, vector<1x16xf32>
    %cst_9 = arith.constant 0.000000e+00 : f32
    %29 = vector.shape_cast %28 : vector<1x16xf32> to vector<1x16xf32>
    %30 = vector.broadcast %29 : vector<1x16xf32> to vector<128x16xf32>
    %31 = vector.broadcast %cst_9 : f32 to vector<128x16xf32>
    %32 = arith.select %20, %30, %31 : vector<128x16xi1>, vector<128x16xf32>
    %cst_10 = arith.constant dense<0.000000e+00> : vector<128xf32>
    %33 = vector.multi_reduction <add>, %32, %cst_10 [1] : vector<128x16xf32> to vector<128xf32>
    %34 = vector.shape_cast %33 : vector<128xf32> to vector<128x1xf32>
    %35 = arith.mulf %26, %34 : vector<128x1xf32>
    %cst_11 = arith.constant 1.000000e+00 : f32
    %36 = vector.broadcast %cst_11 : f32 to vector<128x1xf32>
    %37 = arith.subf %36, %27 : vector<128x1xf32>
    %38 = arith.mulf %37, %37 : vector<128x1xf32>
    %39 = arith.mulf %38, %35 : vector<128x1xf32>
    %cst_12 = arith.constant 0.000000e+00 : f32
    %40 = vector.broadcast %cst_12 : f32 to vector<128x1xf32>
    %41 = arith.subf %40, %39 : vector<128x1xf32>
    %42 = tpu.iota {dimensions = array<i32: 0>} : vector<128x1xi32>
    %c128_i32 = arith.constant 128 : i32
    %43 = arith.muli %arg0, %c128_i32 : i32
    %44 = vector.broadcast %43 : i32 to vector<128x1xi32>
    %45 = arith.addi %44, %42 : vector<128x1xi32>
    %c8_i32 = arith.constant 8 : i32
    %46 = vector.broadcast %c8_i32 : i32 to vector<128x1xi32>
    %47 = arith.cmpi slt, %45, %46 : vector<128x1xi32>
    %cst_13 = arith.constant 0.000000e+00 : f32
    %48 = vector.broadcast %cst_13 : f32 to vector<128x1xf32>
    %49 = arith.select %47, %41, %48 : vector<128x1xi1>, vector<128x1xf32>
    %50 = vector.shape_cast %49 : vector<128x1xf32> to vector<1x128x1xf32>
    %cst_14 = arith.constant dense<0.000000e+00> : vector<1xf32>
    %51 = vector.multi_reduction <add>, %50, %cst_14 [1, 2] : vector<1x128x1xf32> to vector<1xf32>
    %52 = vector.shape_cast %51 : vector<1xf32> to vector<1x1x1xf32>
    %53 = vector.extract %52[0, 0, 0] : f32 from vector<1x1x1xf32>
    %54 = tpu.iota {dimensions = array<i32: 1>} : vector<1x128xi32>
    %c0_i32_15 = arith.constant 0 : i32
    %55 = vector.broadcast %c0_i32_15 : i32 to vector<1x128xi32>
    %56 = arith.cmpi eq, %54, %55 : vector<1x128xi32>
    %cst_16 = arith.constant 0.000000e+00 : f32
    %57 = vector.broadcast %53 : f32 to vector<1x128xf32>
    %58 = vector.broadcast %cst_16 : f32 to vector<1x128xf32>
    %59 = arith.select %56, %57, %58 : vector<1x128xi1>, vector<1x128xf32>
    %c0_17 = arith.constant 0 : index
    %c0_18 = arith.constant 0 : index
    %60 = vector.load %arg4[%c0_17, %c0_18] : memref<1x128xf32, #tpu.memory_space<vmem>>, vector<1x128xf32>
    tpu.vector_store %arg4[%c0_17, %c0_18], %59 {strides = array<i32>} : memref<1x128xf32, #tpu.memory_space<vmem>>, vector<1x128xf32>,
    return
  }
  func.func @transform_0(%arg0: i32) -> (i32, i32) {
    %c0_i32 = arith.constant 0 : i32
    %c0_i32_0 = arith.constant 0 : i32
    return %arg0, %c0_i32 : i32, i32
  }
  func.func @transform_1(%arg0: i32) -> (i32, i32) {
    %c0_i32 = arith.constant 0 : i32
    %c0_i32_0 = arith.constant 0 : i32
    return %c0_i32, %arg0 : i32, i32
  }
  func.func @transform_2(%arg0: i32) -> (i32, i32) {
    %c0_i32 = arith.constant 0 : i32
    %c0_i32_0 = arith.constant 0 : i32
    %c0_i32_1 = arith.constant 0 : i32
    return %c0_i32, %c0_i32_0 : i32, i32
  }
  func.func @transform_3(%arg0: i32) -> (i32, i32) {
    %c0_i32 = arith.constant 0 : i32
    %c0_i32_0 = arith.constant 0 : i32
    return %c0_i32, %arg0 : i32, i32
  }
}

</mosaic_0001>

<llo_original>
// kernel: tpu_custom_call.1
$region0: #{tpu_custom_call.1}
  #allocation0 [shape = 'u32[]', space=smem, size = 0x4, offset = 0x4, fixed_abs, tag = 'smem constant byte address 0x4 - core index']
  #allocation1 [shape = 'u32[144,128]{1,0:T(1,128)}', space=vmem, size = 0x12000, scoped, tag = 'internal scratch']
  %s0 = inlined_call_operand.hbm [shape: f32[8,16], index: 0, kind: input, shape index: {}]
  %s1 = inlined_call_operand.vmem [shape: s32[1,8], index: 1, kind: input, shape index: {}]
  %s2 = inlined_call_operand.vmem [shape: f32[1,16], index: 2, kind: input, shape index: {}]
  %s3 = inlined_call_operand.hbm [shape: f32[1,128], index: 3, kind: output, shape index: {}]
  %s4 = sld [smem:[#allocation0]]
  $region26: #{tpu_custom_call.1} parent=0
    _
  %s6 = ssub.s32 1, %s4
  %s7 = scalar_select 0, %s6, %s4
  $region1: #{tpu_custom_call.1} parent=0
    #allocation2 [shape = 'u8[65536]{0}', space=vmem, size = 0x10000, scoped, tag = 'input window, operand 0, single buffered']
    #allocation3 [shape = 's32[1]{0}', space=sflag, size = 0x4, scoped, tag = 'scoped memory for tpu_custom_call.1']
    #allocation4 [shape = 's32[1]{0}', space=sflag, size = 0x4, scoped, tag = 'scoped memory for tpu_custom_call.1']
    #allocation5 [shape = 'u8[512]{0}', space=vmem, size = 0x400, scoped, tag = 'output window, operand 0, single buffered']
    %8 = vsyncpa [#allocation3], 0
    %9 = vsyncpa [#allocation4], 0
    // Predicated region
    $region2: #{tpu_custom_call.1} parent=1 // pred_check
      _
    $region3: #{tpu_custom_call.1} parent=1 // pred_check_branch
      %11 = sbr.rel (0) target = $region5
    $region4: #{tpu_custom_call.1} parent=1 // pred_region
      %s13 = ssub.s32 2048, 128
      %14 = vsyncadd [#allocation3], %s13
      %s15 = sshll.u32 [#allocation2], 4
      %s16 = int_to_ptr.vmem [resolvable:$true] %s15
      %21 = dma.hbm_to_vmem [thread:$0]  %s0, 128, %s16, [#allocation3], 128, 128, 8
    $region5: #{tpu_custom_call.1} parent=1 // pred_fallthru
      _
    // Predicated region
    $region6: #{tpu_custom_call.1} parent=1 // pred_check
      _
    $region7: #{tpu_custom_call.1} parent=1 // pred_check_branch
      %23 = sbr.rel (0) target = $region9
    $region8: #{tpu_custom_call.1} parent=1 // pred_region
      _
    $region9: #{tpu_custom_call.1} parent=1 // pred_fallthru
      _
    // Predicated region
    $region10: #{tpu_custom_call.1} parent=1 // pred_check
      _
    $region11: #{tpu_custom_call.1} parent=1 // pred_check_branch
      %25 = sbr.rel (0) target = $region13
    $region12: #{tpu_custom_call.1} parent=1 // pred_region
      _
    $region13: #{tpu_custom_call.1} parent=1 // pred_fallthru
      _
    // Predicated region
    $region14: #{tpu_custom_call.1} parent=1 // pred_check
      _
    $region15: #{tpu_custom_call.1} parent=1 // pred_check_branch
      %27 = sbr.rel (0) target = $region17
    $region16: #{tpu_custom_call.1} parent=1 // pred_region
      %28 = dma.done [#allocation3], 2048
    $region17: #{tpu_custom_call.1} parent=1 // pred_fallthru
      _
    %v29 = vld [vmem:[#allocation2] sm:$0xff]
    %v30 = vld [vmem:[#allocation2 + $0x8] sm:$0xff]
    %v31 = vld [vmem:[#allocation2 + $0x10] sm:$0xff]
    %v32 = vld [vmem:[#allocation2 + $0x18] sm:$0xff]
    %v33 = vld [vmem:[#allocation2 + $0x20] sm:$0xff]
    %v34 = vld [vmem:[#allocation2 + $0x28] sm:$0xff]
    %v35 = vld [vmem:[#allocation2 + $0x30] sm:$0xff]
    %v36 = vld [vmem:[#allocation2 + $0x38] sm:$0xff]
    %v37 = vld [vmem:[#allocation2 + $0x40] sm:$0xff]
    %v38 = vld [vmem:[#allocation2 + $0x48] sm:$0xff]
    %v39 = vld [vmem:[#allocation2 + $0x50] sm:$0xff]
    %v40 = vld [vmem:[#allocation2 + $0x58] sm:$0xff]
    %v41 = vld [vmem:[#allocation2 + $0x60] sm:$0xff]
    %v42 = vld [vmem:[#allocation2 + $0x68] sm:$0xff]
    %v43 = vld [vmem:[#allocation2 + $0x70] sm:$0xff]
    %v44 = vld [vmem:[#allocation2 + $0x78] sm:$0xff]
    %v45 = vld [vmem:[%s1] sm:$0x1]
    %v46 = vlaneseq
    %v47 = vshrl.u32 %v46, 7
    %v48 = vadd.s32 %v47, 8
    %v49 = vadd.s32 %v47, 16
    %v50 = vadd.s32 %v47, 24
    %v51 = vadd.s32 %v47, 32
    %v52 = vadd.s32 %v47, 40
    %v53 = vadd.s32 %v47, 48
    %v54 = vadd.s32 %v47, 56
    %v55 = vadd.s32 %v47, 64
    %v56 = vadd.s32 %v47, 72
    %v57 = vadd.s32 %v47, 80
    %v58 = vadd.s32 %v47, 88
    %v59 = vadd.s32 %v47, 96
    %v60 = vadd.s32 %v47, 104
    %v61 = vadd.s32 %v47, 112
    %v62 = vadd.s32 %v47, 120
    %v63 = vlaneseq
    %v64 = vand.u32 %v63, 127
    %vm65 = vcmp.eq.s32.totalorder %v47, %v64
    %vm66 = vcmp.eq.s32.totalorder %v48, %v64
    %vm67 = vcmp.eq.s32.totalorder %v49, %v64
    %vm68 = vcmp.eq.s32.totalorder %v50, %v64
    %vm69 = vcmp.eq.s32.totalorder %v51, %v64
    %vm70 = vcmp.eq.s32.totalorder %v52, %v64
    %vm71 = vcmp.eq.s32.totalorder %v53, %v64
    %vm72 = vcmp.eq.s32.totalorder %v54, %v64
    %vm73 = vcmp.eq.s32.totalorder %v55, %v64
    %vm74 = vcmp.eq.s32.totalorder %v56, %v64
    %vm75 = vcmp.eq.s32.totalorder %v57, %v64
    %vm76 = vcmp.eq.s32.totalorder %v58, %v64
    %vm77 = vcmp.eq.s32.totalorder %v59, %v64
    %vm78 = vcmp.eq.s32.totalorder %v60, %v64
    %vm79 = vcmp.eq.s32.totalorder %v61, %v64
    %vm80 = vcmp.eq.s32.totalorder %v62, %v64
    %v81 = vlaneseq
    %v82 = vshrl.u32 %v81, 7
    %v83 = vsub.s32 0, %v82
    %v84 = vrot.slane %v45, %v83
    %v85 = vsel %vm65, %v84, 0
    %v86 = vsel %vm66, %v84, 0
    %v87 = vsel %vm67, %v84, 0
    %v88 = vsel %vm68, %v84, 0
    %v89 = vsel %vm69, %v84, 0
    %v90 = vsel %vm70, %v84, 0
    %v91 = vsel %vm71, %v84, 0
    %v92 = vsel %vm72, %v84, 0
    %v93 = vsel %vm73, %v84, 0
    %v94 = vsel %vm74, %v84, 0
    %v95 = vsel %vm75, %v84, 0
    %v96 = vsel %vm76, %v84, 0
    %v97 = vsel %vm77, %v84, 0
    %v98 = vsel %vm78, %v84, 0
    %v99 = vsel %vm79, %v84, 0
    %v100 = vsel %vm80, %v84, 0
    %v101 = vand.u32 %v85, 65535
    %v102 = vshrl.u32 %v85, 16
    %v103 = vcvt.s32.f32 %v101
    %v104 = vcvt.s32.f32 %v102
    %105 = vadd.xlane.f32.xlu0 %v103
    %v106 = vpop.xlane.xlu0 %105
    %107 = vadd.xlane.f32.xlu0 %v104
    %v108 = vpop.xlane.xlu0 %107
    %v109 = vcvt.f32.s32 %v106
    %v110 = vcvt.f32.s32 %v108
    %v111 = vshll.u32 %v110, 16
    %v112 = vadd.s32 %v111, %v109
    %v113 = vand.u32 %v86, 65535
    %v114 = vshrl.u32 %v86, 16
    %v115 = vcvt.s32.f32 %v113
    %v116 = vcvt.s32.f32 %v114
    %117 = vadd.xlane.f32.xlu0 %v115
    %v118 = vpop.xlane.xlu0 %117
    %119 = vadd.xlane.f32.xlu0 %v116
    %v120 = vpop.xlane.xlu0 %119
    %v121 = vcvt.f32.s32 %v118
    %v122 = vcvt.f32.s32 %v120
    %v123 = vshll.u32 %v122, 16
    %v124 = vadd.s32 %v123, %v121
    %v125 = vand.u32 %v87, 65535
    %v126 = vshrl.u32 %v87, 16
    %v127 = vcvt.s32.f32 %v125
    %v128 = vcvt.s32.f32 %v126
    %129 = vadd.xlane.f32.xlu0 %v127
    %v130 = vpop.xlane.xlu0 %129
    %131 = vadd.xlane.f32.xlu0 %v128
    %v132 = vpop.xlane.xlu0 %131
    %v133 = vcvt.f32.s32 %v130
    %v134 = vcvt.f32.s32 %v132
    %v135 = vshll.u32 %v134, 16
    %v136 = vadd.s32 %v135, %v133
    %v137 = vand.u32 %v88, 65535
    %v138 = vshrl.u32 %v88, 16
    %v139 = vcvt.s32.f32 %v137
    %v140 = vcvt.s32.f32 %v138
    %141 = vadd.xlane.f32.xlu0 %v139
    %v142 = vpop.xlane.xlu0 %141
    %143 = vadd.xlane.f32.xlu0 %v140
    %v144 = vpop.xlane.xlu0 %143
    %v145 = vcvt.f32.s32 %v142
    %v146 = vcvt.f32.s32 %v144
    %v147 = vshll.u32 %v146, 16
    %v148 = vadd.s32 %v147, %v145
    %v149 = vand.u32 %v89, 65535
    %v150 = vshrl.u32 %v89, 16
    %v151 = vcvt.s32.f32 %v149
    %v152 = vcvt.s32.f32 %v150
    %153 = vadd.xlane.f32.xlu0 %v151
    %v154 = vpop.xlane.xlu0 %153
    %155 = vadd.xlane.f32.xlu0 %v152
    %v156 = vpop.xlane.xlu0 %155
    %v157 = vcvt.f32.s32 %v154
    %v158 = vcvt.f32.s32 %v156
    %v159 = vshll.u32 %v158, 16
    %v160 = vadd.s32 %v159, %v157
    %v161 = vand.u32 %v90, 65535
    %v162 = vshrl.u32 %v90, 16
    %v163 = vcvt.s32.f32 %v161
    %v164 = vcvt.s32.f32 %v162
    %165 = vadd.xlane.f32.xlu0 %v163
    %v166 = vpop.xlane.xlu0 %165
    %167 = vadd.xlane.f32.xlu0 %v164
    %v168 = vpop.xlane.xlu0 %167
    %v169 = vcvt.f32.s32 %v166
    %v170 = vcvt.f32.s32 %v168
    %v171 = vshll.u32 %v170, 16
    %v172 = vadd.s32 %v171, %v169
    %v173 = vand.u32 %v91, 65535
    %v174 = vshrl.u32 %v91, 16
    %v175 = vcvt.s32.f32 %v173
    %v176 = vcvt.s32.f32 %v174
    %177 = vadd.xlane.f32.xlu0 %v175
    %v178 = vpop.xlane.xlu0 %177
    %179 = vadd.xlane.f32.xlu0 %v176
    %v180 = vpop.xlane.xlu0 %179
    %v181 = vcvt.f32.s32 %v178
    %v182 = vcvt.f32.s32 %v180
    %v183 = vshll.u32 %v182, 16
    %v184 = vadd.s32 %v183, %v181
    %v185 = vand.u32 %v92, 65535
    %v186 = vshrl.u32 %v92, 16
    %v187 = vcvt.s32.f32 %v185
    %v188 = vcvt.s32.f32 %v186
    %189 = vadd.xlane.f32.xlu0 %v187
    %v190 = vpop.xlane.xlu0 %189
    %191 = vadd.xlane.f32.xlu0 %v188
    %v192 = vpop.xlane.xlu0 %191
    %v193 = vcvt.f32.s32 %v190
    %v194 = vcvt.f32.s32 %v192
    %v195 = vshll.u32 %v194, 16
    %v196 = vadd.s32 %v195, %v193
    %v197 = vand.u32 %v93, 65535
    %v198 = vshrl.u32 %v93, 16
    %v199 = vcvt.s32.f32 %v197
    %v200 = vcvt.s32.f32 %v198
    %201 = vadd.xlane.f32.xlu0 %v199
    %v202 = vpop.xlane.xlu0 %201
    %203 = vadd.xlane.f32.xlu0 %v200
    %v204 = vpop.xlane.xlu0 %203
    %v205 = vcvt.f32.s32 %v202
    %v206 = vcvt.f32.s32 %v204
    %v207 = vshll.u32 %v206, 16
    %v208 = vadd.s32 %v207, %v205
    %v209 = vand.u32 %v94, 65535
    %v210 = vshrl.u32 %v94, 16
    %v211 = vcvt.s32.f32 %v209
    %v212 = vcvt.s32.f32 %v210
    %213 = vadd.xlane.f32.xlu0 %v211
    %v214 = vpop.xlane.xlu0 %213
    %215 = vadd.xlane.f32.xlu0 %v212
    %v216 = vpop.xlane.xlu0 %215
    %v217 = vcvt.f32.s32 %v214
    %v218 = vcvt.f32.s32 %v216
    %v219 = vshll.u32 %v218, 16
    %v220 = vadd.s32 %v219, %v217
    %v221 = vand.u32 %v95, 65535
    %v222 = vshrl.u32 %v95, 16
    %v223 = vcvt.s32.f32 %v221
    %v224 = vcvt.s32.f32 %v222
    %225 = vadd.xlane.f32.xlu0 %v223
    %v226 = vpop.xlane.xlu0 %225
    %227 = vadd.xlane.f32.xlu0 %v224
    %v228 = vpop.xlane.xlu0 %227
    %v229 = vcvt.f32.s32 %v226
    %v230 = vcvt.f32.s32 %v228
    %v231 = vshll.u32 %v230, 16
    %v232 = vadd.s32 %v231, %v229
    %v233 = vand.u32 %v96, 65535
    %v234 = vshrl.u32 %v96, 16
    %v235 = vcvt.s32.f32 %v233
    %v236 = vcvt.s32.f32 %v234
    %237 = vadd.xlane.f32.xlu0 %v235
    %v238 = vpop.xlane.xlu0 %237
    %239 = vadd.xlane.f32.xlu0 %v236
    %v240 = vpop.xlane.xlu0 %239
    %v241 = vcvt.f32.s32 %v238
    %v242 = vcvt.f32.s32 %v240
    %v243 = vshll.u32 %v242, 16
    %v244 = vadd.s32 %v243, %v241
    %v245 = vand.u32 %v97, 65535
    %v246 = vshrl.u32 %v97, 16
    %v247 = vcvt.s32.f32 %v245
    %v248 = vcvt.s32.f32 %v246
    %249 = vadd.xlane.f32.xlu0 %v247
    %v250 = vpop.xlane.xlu0 %249
    %251 = vadd.xlane.f32.xlu0 %v248
    %v252 = vpop.xlane.xlu0 %251
    %v253 = vcvt.f32.s32 %v250
    %v254 = vcvt.f32.s32 %v252
    %v255 = vshll.u32 %v254, 16
    %v256 = vadd.s32 %v255, %v253
    %v257 = vand.u32 %v98, 65535
    %v258 = vshrl.u32 %v98, 16
    %v259 = vcvt.s32.f32 %v257
    %v260 = vcvt.s32.f32 %v258
    %261 = vadd.xlane.f32.xlu0 %v259
    %v262 = vpop.xlane.xlu0 %261
    %263 = vadd.xlane.f32.xlu0 %v260
    %v264 = vpop.xlane.xlu0 %263
    %v265 = vcvt.f32.s32 %v262
    %v266 = vcvt.f32.s32 %v264
    %v267 = vshll.u32 %v266, 16
    %v268 = vadd.s32 %v267, %v265
    %v269 = vand.u32 %v99, 65535
    %v270 = vshrl.u32 %v99, 16
    %v271 = vcvt.s32.f32 %v269
    %v272 = vcvt.s32.f32 %v270
    %273 = vadd.xlane.f32.xlu0 %v271
    %v274 = vpop.xlane.xlu0 %273
    %275 = vadd.xlane.f32.xlu0 %v272
    %v276 = vpop.xlane.xlu0 %275
    %v277 = vcvt.f32.s32 %v274
    %v278 = vcvt.f32.s32 %v276
    %v279 = vshll.u32 %v278, 16
    %v280 = vadd.s32 %v279, %v277
    %v281 = vand.u32 %v100, 65535
    %v282 = vshrl.u32 %v100, 16
    %v283 = vcvt.s32.f32 %v281
    %v284 = vcvt.s32.f32 %v282
    %285 = vadd.xlane.f32.xlu0 %v283
    %v286 = vpop.xlane.xlu0 %285
    %287 = vadd.xlane.f32.xlu0 %v284
    %v288 = vpop.xlane.xlu0 %287
    %v289 = vcvt.f32.s32 %v286
    %v290 = vcvt.f32.s32 %v288
    %v291 = vshll.u32 %v290, 16
    %v292 = vadd.s32 %v291, %v289
    %vm293 = vcmask 130048
    %v294 = vsel %vm293, %v29, -inf
    %295 = vmax.xlane.f32.xlu0 %v294
    %v296 = vpop.xlane.xlu0 %295
    %v297 = vsel %vm293, %v30, -inf
    %298 = vmax.xlane.f32.xlu0 %v297
    %v299 = vpop.xlane.xlu0 %298
    %v300 = vsel %vm293, %v31, -inf
    %301 = vmax.xlane.f32.xlu0 %v300
    %v302 = vpop.xlane.xlu0 %301
    %v303 = vsel %vm293, %v32, -inf
    %304 = vmax.xlane.f32.xlu0 %v303
    %v305 = vpop.xlane.xlu0 %304
    %v306 = vsel %vm293, %v33, -inf
    %307 = vmax.xlane.f32.xlu0 %v306
    %v308 = vpop.xlane.xlu0 %307
    %v309 = vsel %vm293, %v34, -inf
    %310 = vmax.xlane.f32.xlu0 %v309
    %v311 = vpop.xlane.xlu0 %310
    %v312 = vsel %vm293, %v35, -inf
    %313 = vmax.xlane.f32.xlu0 %v312
    %v314 = vpop.xlane.xlu0 %313
    %v315 = vsel %vm293, %v36, -inf
    %316 = vmax.xlane.f32.xlu0 %v315
    %v317 = vpop.xlane.xlu0 %316
    %v318 = vsel %vm293, %v37, -inf
    %319 = vmax.xlane.f32.xlu0 %v318
    %v320 = vpop.xlane.xlu0 %319
    %v321 = vsel %vm293, %v38, -inf
    %322 = vmax.xlane.f32.xlu0 %v321
    %v323 = vpop.xlane.xlu0 %322
    %v324 = vsel %vm293, %v39, -inf
    %325 = vmax.xlane.f32.xlu0 %v324
    %v326 = vpop.xlane.xlu0 %325
    %v327 = vsel %vm293, %v40, -inf
    %328 = vmax.xlane.f32.xlu0 %v327
    %v329 = vpop.xlane.xlu0 %328
    %v330 = vsel %vm293, %v41, -inf
    %331 = vmax.xlane.f32.xlu0 %v330
    %v332 = vpop.xlane.xlu0 %331
    %v333 = vsel %vm293, %v42, -inf
    %334 = vmax.xlane.f32.xlu0 %v333
    %v335 = vpop.xlane.xlu0 %334
    %v336 = vsel %vm293, %v43, -inf
    %337 = vmax.xlane.f32.xlu0 %v336
    %v338 = vpop.xlane.xlu0 %337
    %v339 = vsel %vm293, %v44, -inf
    %340 = vmax.xlane.f32.xlu0 %v339
    %v341 = vpop.xlane.xlu0 %340
    %v342 = vsub.f32 %v29, %v296
    %v343 = vsub.f32 %v30, %v299
    %v344 = vsub.f32 %v31, %v302
    %v345 = vsub.f32 %v32, %v305
    %v346 = vsub.f32 %v33, %v308
    %v347 = vsub.f32 %v34, %v311
    %v348 = vsub.f32 %v35, %v314
    %v349 = vsub.f32 %v36, %v317
    %v350 = vsub.f32 %v37, %v320
    %v351 = vsub.f32 %v38, %v323
    %v352 = vsub.f32 %v39, %v326
    %v353 = vsub.f32 %v40, %v329
    %v354 = vsub.f32 %v41, %v332
    %v355 = vsub.f32 %v42, %v335
    %v356 = vsub.f32 %v43, %v338
    %v357 = vsub.f32 %v44, %v341
    %v358 = vmul.f32 %v342, 1.442695
    %v359 = vpow.pop %v358
    %v360 = vmul.f32 %v343, 1.442695
    %v361 = vpow.pop %v360
    %v362 = vmul.f32 %v344, 1.442695
    %v363 = vpow.pop %v362
    %v364 = vmul.f32 %v345, 1.442695
    %v365 = vpow.pop %v364
    %v366 = vmul.f32 %v346, 1.442695
    %v367 = vpow.pop %v366
    %v368 = vmul.f32 %v347, 1.442695
    %v369 = vpow.pop %v368
    %v370 = vmul.f32 %v348, 1.442695
    %v371 = vpow.pop %v370
    %v372 = vmul.f32 %v349, 1.442695
    %v373 = vpow.pop %v372
    %v374 = vmul.f32 %v350, 1.442695
    %v375 = vpow.pop %v374
    %v376 = vmul.f32 %v351, 1.442695
    %v377 = vpow.pop %v376
    %v378 = vmul.f32 %v352, 1.442695
    %v379 = vpow.pop %v378
    %v380 = vmul.f32 %v353, 1.442695
    %v381 = vpow.pop %v380
    %v382 = vmul.f32 %v354, 1.442695
    %v383 = vpow.pop %v382
    %v384 = vmul.f32 %v355, 1.442695
    %v385 = vpow.pop %v384
    %v386 = vmul.f32 %v356, 1.442695
    %v387 = vpow.pop %v386
    %v388 = vmul.f32 %v357, 1.442695
    %v389 = vpow.pop %v388
    %v390 = vsel %vm293, %v359, 0.0
    %391 = vadd.xlane.f32.xlu0 %v390
    %v392 = vpop.xlane.xlu0 %391
    %v393 = vsel %vm293, %v361, 0.0
    %394 = vadd.xlane.f32.xlu0 %v393
    %v395 = vpop.xlane.xlu0 %394
    %v396 = vsel %vm293, %v363, 0.0
    %397 = vadd.xlane.f32.xlu0 %v396
    %v398 = vpop.xlane.xlu0 %397
    %v399 = vsel %vm293, %v365, 0.0
    %400 = vadd.xlane.f32.xlu0 %v399
    %v401 = vpop.xlane.xlu0 %400
    %v402 = vsel %vm293, %v367, 0.0
    %403 = vadd.xlane.f32.xlu0 %v402
    %v404 = vpop.xlane.xlu0 %403
    %v405 = vsel %vm293, %v369, 0.0
    %406 = vadd.xlane.f32.xlu0 %v405
    %v407 = vpop.xlane.xlu0 %406
    %v408 = vsel %vm293, %v371, 0.0
    %409 = vadd.xlane.f32.xlu0 %v408
    %v410 = vpop.xlane.xlu0 %409
    %v411 = vsel %vm293, %v373, 0.0
    %412 = vadd.xlane.f32.xlu0 %v411
    %v413 = vpop.xlane.xlu0 %412
    %v414 = vsel %vm293, %v375, 0.0
    %415 = vadd.xlane.f32.xlu0 %v414
    %v416 = vpop.xlane.xlu0 %415
    %v417 = vsel %vm293, %v377, 0.0
    %418 = vadd.xlane.f32.xlu0 %v417
    %v419 = vpop.xlane.xlu0 %418
    %v420 = vsel %vm293, %v379, 0.0
    %421 = vadd.xlane.f32.xlu0 %v420
    %v422 = vpop.xlane.xlu0 %421
    %v423 = vsel %vm293, %v381, 0.0
    %424 = vadd.xlane.f32.xlu0 %v423
    %v425 = vpop.xlane.xlu0 %424
    %v426 = vsel %vm293, %v383, 0.0
    %427 = vadd.xlane.f32.xlu0 %v426
    %v428 = vpop.xlane.xlu0 %427
    %v429 = vsel %vm293, %v385, 0.0
    %430 = vadd.xlane.f32.xlu0 %v429
    %v431 = vpop.xlane.xlu0 %430
    %v432 = vsel %vm293, %v387, 0.0
    %433 = vadd.xlane.f32.xlu0 %v432
    %v434 = vpop.xlane.xlu0 %433
    %v435 = vsel %vm293, %v389, 0.0
    %436 = vadd.xlane.f32.xlu0 %v435
    %v437 = vpop.xlane.xlu0 %436
    %vm438 = vcmp.eq.s32.totalorder %v64, %v112
    %vm439 = vcmp.eq.s32.totalorder %v64, %v124
    %vm440 = vcmp.eq.s32.totalorder %v64, %v136
    %vm441 = vcmp.eq.s32.totalorder %v64, %v148
    %vm442 = vcmp.eq.s32.totalorder %v64, %v160
    %vm443 = vcmp.eq.s32.totalorder %v64, %v172
    %vm444 = vcmp.eq.s32.totalorder %v64, %v184
    %vm445 = vcmp.eq.s32.totalorder %v64, %v196
    %vm446 = vcmp.eq.s32.totalorder %v64, %v208
    %vm447 = vcmp.eq.s32.totalorder %v64, %v220
    %vm448 = vcmp.eq.s32.totalorder %v64, %v232
    %vm449 = vcmp.eq.s32.totalorder %v64, %v244
    %vm450 = vcmp.eq.s32.totalorder %v64, %v256
    %vm451 = vcmp.eq.s32.totalorder %v64, %v268
    %vm452 = vcmp.eq.s32.totalorder %v64, %v280
    %vm453 = vcmp.eq.s32.totalorder %v64, %v292
    %v454 = vsel %vm438, %v342, 0.0
    %v455 = vsel %vm439, %v343, 0.0
    %v456 = vsel %vm440, %v344, 0.0
    %v457 = vsel %vm441, %v345, 0.0
    %v458 = vsel %vm442, %v346, 0.0
    %v459 = vsel %vm443, %v347, 0.0
    %v460 = vsel %vm444, %v348, 0.0
    %v461 = vsel %vm445, %v349, 0.0
    %v462 = vsel %vm446, %v350, 0.0
    %v463 = vsel %vm447, %v351, 0.0
    %v464 = vsel %vm448, %v352, 0.0
    %v465 = vsel %vm449, %v353, 0.0
    %v466 = vsel %vm450, %v354, 0.0
    %v467 = vsel %vm451, %v355, 0.0
    %v468 = vsel %vm452, %v356, 0.0
    %v469 = vsel %vm453, %v357, 0.0
    %v470 = vsel %vm293, %v454, 0.0
    %471 = vadd.xlane.f32.xlu0 %v470
    %v472 = vpop.xlane.xlu0 %471
    %v473 = vsel %vm293, %v455, 0.0
    %474 = vadd.xlane.f32.xlu0 %v473
    %v475 = vpop.xlane.xlu0 %474
    %v476 = vsel %vm293, %v456, 0.0
    %477 = vadd.xlane.f32.xlu0 %v476
    %v478 = vpop.xlane.xlu0 %477
    %v479 = vsel %vm293, %v457, 0.0
    %480 = vadd.xlane.f32.xlu0 %v479
    %v481 = vpop.xlane.xlu0 %480
    %v482 = vsel %vm293, %v458, 0.0
    %483 = vadd.xlane.f32.xlu0 %v482
    %v484 = vpop.xlane.xlu0 %483
    %v485 = vsel %vm293, %v459, 0.0
    %486 = vadd.xlane.f32.xlu0 %v485
    %v487 = vpop.xlane.xlu0 %486
    %v488 = vsel %vm293, %v460, 0.0
    %489 = vadd.xlane.f32.xlu0 %v488
    %v490 = vpop.xlane.xlu0 %489
    %v491 = vsel %vm293, %v461, 0.0
    %492 = vadd.xlane.f32.xlu0 %v491
    %v493 = vpop.xlane.xlu0 %492
    %v494 = vsel %vm293, %v462, 0.0
    %495 = vadd.xlane.f32.xlu0 %v494
    %v496 = vpop.xlane.xlu0 %495
    %v497 = vsel %vm293, %v463, 0.0
    %498 = vadd.xlane.f32.xlu0 %v497
    %v499 = vpop.xlane.xlu0 %498
    %v500 = vsel %vm293, %v464, 0.0
    %501 = vadd.xlane.f32.xlu0 %v500
    %v502 = vpop.xlane.xlu0 %501
    %v503 = vsel %vm293, %v465, 0.0
    %504 = vadd.xlane.f32.xlu0 %v503
    %v505 = vpop.xlane.xlu0 %504
    %v506 = vsel %vm293, %v466, 0.0
    %507 = vadd.xlane.f32.xlu0 %v506
    %v508 = vpop.xlane.xlu0 %507
    %v509 = vsel %vm293, %v467, 0.0
    %510 = vadd.xlane.f32.xlu0 %v509
    %v511 = vpop.xlane.xlu0 %510
    %v512 = vsel %vm293, %v468, 0.0
    %513 = vadd.xlane.f32.xlu0 %v512
    %v514 = vpop.xlane.xlu0 %513
    %v515 = vsel %vm293, %v469, 0.0
    %516 = vadd.xlane.f32.xlu0 %v515
    %v517 = vpop.xlane.xlu0 %516
    %v518 = vlog2.pop %v392
    %v519 = vmul.f32 %v518, 0.6931472
    %v520 = vlog2.pop %v395
    %v521 = vmul.f32 %v520, 0.6931472
    %v522 = vlog2.pop %v398
    %v523 = vmul.f32 %v522, 0.6931472
    %v524 = vlog2.pop %v401
    %v525 = vmul.f32 %v524, 0.6931472
    %v526 = vlog2.pop %v404
    %v527 = vmul.f32 %v526, 0.6931472
    %v528 = vlog2.pop %v407
    %v529 = vmul.f32 %v528, 0.6931472
    %v530 = vlog2.pop %v410
    %v531 = vmul.f32 %v530, 0.6931472
    %v532 = vlog2.pop %v413
    %v533 = vmul.f32 %v532, 0.6931472
    %v534 = vlog2.pop %v416
    %v535 = vmul.f32 %v534, 0.6931472
    %v536 = vlog2.pop %v419
    %v537 = vmul.f32 %v536, 0.6931472
    %v538 = vlog2.pop %v422
    %v539 = vmul.f32 %v538, 0.6931472
    %v540 = vlog2.pop %v425
    %v541 = vmul.f32 %v540, 0.6931472
    %v542 = vlog2.pop %v428
    %v543 = vmul.f32 %v542, 0.6931472
    %v544 = vlog2.pop %v431
    %v545 = vmul.f32 %v544, 0.6931472
    %v546 = vlog2.pop %v434
    %v547 = vmul.f32 %v546, 0.6931472
    %v548 = vlog2.pop %v437
    %v549 = vmul.f32 %v548, 0.6931472
    %v550 = vsub.f32 %v472, %v519
    %v551 = vsub.f32 %v475, %v521
    %v552 = vsub.f32 %v478, %v523
    %v553 = vsub.f32 %v481, %v525
    %v554 = vsub.f32 %v484, %v527
    %v555 = vsub.f32 %v487, %v529
    %v556 = vsub.f32 %v490, %v531
    %v557 = vsub.f32 %v493, %v533
    %v558 = vsub.f32 %v496, %v535
    %v559 = vsub.f32 %v499, %v537
    %v560 = vsub.f32 %v502, %v539
    %v561 = vsub.f32 %v505, %v541
    %v562 = vsub.f32 %v508, %v543
    %v563 = vsub.f32 %v511, %v545
    %v564 = vsub.f32 %v514, %v547
    %v565 = vsub.f32 %v517, %v549
    %v566 = vmul.f32 %v550, 1.442695
    %v567 = vpow.pop %v566
    %v568 = vmul.f32 %v551, 1.442695
    %v569 = vpow.pop %v568
    %v570 = vmul.f32 %v552, 1.442695
    %v571 = vpow.pop %v570
    %v572 = vmul.f32 %v553, 1.442695
    %v573 = vpow.pop %v572
    %v574 = vmul.f32 %v554, 1.442695
    %v575 = vpow.pop %v574
    %v576 = vmul.f32 %v555, 1.442695
    %v577 = vpow.pop %v576
    %v578 = vmul.f32 %v556, 1.442695
    %v579 = vpow.pop %v578
    %v580 = vmul.f32 %v557, 1.442695
    %v581 = vpow.pop %v580
    %v582 = vmul.f32 %v558, 1.442695
    %v583 = vpow.pop %v582
    %v584 = vmul.f32 %v559, 1.442695
    %v585 = vpow.pop %v584
    %v586 = vmul.f32 %v560, 1.442695
    %v587 = vpow.pop %v586
    %v588 = vmul.f32 %v561, 1.442695
    %v589 = vpow.pop %v588
    %v590 = vmul.f32 %v562, 1.442695
    %v591 = vpow.pop %v590
    %v592 = vmul.f32 %v563, 1.442695
    %v593 = vpow.pop %v592
    %v594 = vmul.f32 %v564, 1.442695
    %v595 = vpow.pop %v594
    %v596 = vmul.f32 %v565, 1.442695
    %v597 = vpow.pop %v596
    %v598 = vld [vmem:[%s2] sm:$0x1]
    %v600 = vlaneseq
    %v601 = vshrl.u32 %v600, 7
    %v602 = vsub.s32 0, %v601
    %v603 = vrot.slane %v598, %v602
    %v605 = vsel %vm438, %v603, 0.0
    %v606 = vsel %vm439, %v603, 0.0
    %v607 = vsel %vm440, %v603, 0.0
    %v608 = vsel %vm441, %v603, 0.0
    %v609 = vsel %vm442, %v603, 0.0
    %v610 = vsel %vm443, %v603, 0.0
    %v611 = vsel %vm444, %v603, 0.0
    %v612 = vsel %vm445, %v603, 0.0
    %v613 = vsel %vm446, %v603, 0.0
    %v614 = vsel %vm447, %v603, 0.0
    %v615 = vsel %vm448, %v603, 0.0
    %v616 = vsel %vm449, %v603, 0.0
    %v617 = vsel %vm450, %v603, 0.0
    %v618 = vsel %vm451, %v603, 0.0
    %v619 = vsel %vm452, %v603, 0.0
    %v620 = vsel %vm453, %v603, 0.0
    %v621 = vsel %vm293, %v605, 0.0
    %622 = vadd.xlane.f32.xlu0 %v621
    %v623 = vpop.xlane.xlu0 %622
    %v624 = vsel %vm293, %v606, 0.0
    %625 = vadd.xlane.f32.xlu0 %v624
    %v626 = vpop.xlane.xlu0 %625
    %v627 = vsel %vm293, %v607, 0.0
    %628 = vadd.xlane.f32.xlu0 %v627
    %v629 = vpop.xlane.xlu0 %628
    %v630 = vsel %vm293, %v608, 0.0
    %631 = vadd.xlane.f32.xlu0 %v630
    %v632 = vpop.xlane.xlu0 %631
    %v633 = vsel %vm293, %v609, 0.0
    %634 = vadd.xlane.f32.xlu0 %v633
    %v635 = vpop.xlane.xlu0 %634
    %v636 = vsel %vm293, %v610, 0.0
    %637 = vadd.xlane.f32.xlu0 %v636
    %v638 = vpop.xlane.xlu0 %637
    %v639 = vsel %vm293, %v611, 0.0
    %640 = vadd.xlane.f32.xlu0 %v639
    %v641 = vpop.xlane.xlu0 %640
    %v642 = vsel %vm293, %v612, 0.0
    %643 = vadd.xlane.f32.xlu0 %v642
    %v644 = vpop.xlane.xlu0 %643
    %v645 = vsel %vm293, %v613, 0.0
    %646 = vadd.xlane.f32.xlu0 %v645
    %v647 = vpop.xlane.xlu0 %646
    %v648 = vsel %vm293, %v614, 0.0
    %649 = vadd.xlane.f32.xlu0 %v648
    %v650 = vpop.xlane.xlu0 %649
    %v651 = vsel %vm293, %v615, 0.0
    %652 = vadd.xlane.f32.xlu0 %v651
    %v653 = vpop.xlane.xlu0 %652
    %v654 = vsel %vm293, %v616, 0.0
    %655 = vadd.xlane.f32.xlu0 %v654
    %v656 = vpop.xlane.xlu0 %655
    %v657 = vsel %vm293, %v617, 0.0
    %658 = vadd.xlane.f32.xlu0 %v657
    %v659 = vpop.xlane.xlu0 %658
    %v660 = vsel %vm293, %v618, 0.0
    %661 = vadd.xlane.f32.xlu0 %v660
    %v662 = vpop.xlane.xlu0 %661
    %v663 = vsel %vm293, %v619, 0.0
    %664 = vadd.xlane.f32.xlu0 %v663
    %v665 = vpop.xlane.xlu0 %664
    %v666 = vsel %vm293, %v620, 0.0
    %667 = vadd.xlane.f32.xlu0 %v666
    %v668 = vpop.xlane.xlu0 %667
    %v669 = vmul.f32 %v550, %v623
    %v670 = vmul.f32 %v551, %v626
    %v671 = vmul.f32 %v552, %v629
    %v672 = vmul.f32 %v553, %v632
    %v673 = vmul.f32 %v554, %v635
    %v674 = vmul.f32 %v555, %v638
    %v675 = vmul.f32 %v556, %v641
    %v676 = vmul.f32 %v557, %v644
    %v677 = vmul.f32 %v558, %v647
    %v678 = vmul.f32 %v559, %v650
    %v679 = vmul.f32 %v560, %v653
    %v680 = vmul.f32 %v561, %v656
    %v681 = vmul.f32 %v562, %v659
    %v682 = vmul.f32 %v563, %v662
    %v683 = vmul.f32 %v564, %v665
    %v684 = vmul.f32 %v565, %v668
    %v685 = vsub.f32 1.0, %v567
    %v686 = vsub.f32 1.0, %v569
    %v687 = vsub.f32 1.0, %v571
    %v688 = vsub.f32 1.0, %v573
    %v689 = vsub.f32 1.0, %v575
    %v690 = vsub.f32 1.0, %v577
    %v691 = vsub.f32 1.0, %v579
    %v692 = vsub.f32 1.0, %v581
    %v693 = vsub.f32 1.0, %v583
    %v694 = vsub.f32 1.0, %v585
    %v695 = vsub.f32 1.0, %v587
    %v696 = vsub.f32 1.0, %v589
    %v697 = vsub.f32 1.0, %v591
    %v698 = vsub.f32 1.0, %v593
    %v699 = vsub.f32 1.0, %v595
    %v700 = vsub.f32 1.0, %v597
    %v701 = vmul.f32 %v685, %v685
    %v702 = vmul.f32 %v686, %v686
    %v703 = vmul.f32 %v687, %v687
    %v704 = vmul.f32 %v688, %v688
    %v705 = vmul.f32 %v689, %v689
    %v706 = vmul.f32 %v690, %v690
    %v707 = vmul.f32 %v691, %v691
    %v708 = vmul.f32 %v692, %v692
    %v709 = vmul.f32 %v693, %v693
    %v710 = vmul.f32 %v694, %v694
    %v711 = vmul.f32 %v695, %v695
    %v712 = vmul.f32 %v696, %v696
    %v713 = vmul.f32 %v697, %v697
    %v714 = vmul.f32 %v698, %v698
    %v715 = vmul.f32 %v699, %v699
    %v716 = vmul.f32 %v700, %v700
    %v717 = vmul.f32 %v701, %v669
    %v718 = vmul.f32 %v702, %v670
    %v719 = vmul.f32 %v703, %v671
    %v720 = vmul.f32 %v704, %v672
    %v721 = vmul.f32 %v705, %v673
    %v722 = vmul.f32 %v706, %v674
    %v723 = vmul.f32 %v707, %v675
    %v724 = vmul.f32 %v708, %v676
    %v725 = vmul.f32 %v709, %v677
    %v726 = vmul.f32 %v710, %v678
    %v727 = vmul.f32 %v711, %v679
    %v728 = vmul.f32 %v712, %v680
    %v729 = vmul.f32 %v713, %v681
    %v730 = vmul.f32 %v714, %v682
    %v731 = vmul.f32 %v715, %v683
    %v732 = vmul.f32 %v716, %v684
    %v733 = vsub.f32 0.0, %v717
    %v734 = vsub.f32 0.0, %v718
    %v735 = vsub.f32 0.0, %v719
    %v736 = vsub.f32 0.0, %v720
    %v737 = vsub.f32 0.0, %v721
    %v738 = vsub.f32 0.0, %v722
    %v739 = vsub.f32 0.0, %v723
    %v740 = vsub.f32 0.0, %v724
    %v741 = vsub.f32 0.0, %v725
    %v742 = vsub.f32 0.0, %v726
    %v743 = vsub.f32 0.0, %v727
    %v744 = vsub.f32 0.0, %v728
    %v745 = vsub.f32 0.0, %v729
    %v746 = vsub.f32 0.0, %v730
    %v747 = vsub.f32 0.0, %v731
    %v748 = vsub.f32 0.0, %v732
    %s749 = smul.u32 0, 128
    %v750 = vstv %s749
    %v751 = vadd.s32 %v750, %v47
    %v752 = vadd.s32 %v750, %v48
    %v753 = vadd.s32 %v750, %v49
    %v754 = vadd.s32 %v750, %v50
    %v755 = vadd.s32 %v750, %v51
    %v756 = vadd.s32 %v750, %v52
    %v757 = vadd.s32 %v750, %v53
    %v758 = vadd.s32 %v750, %v54
    %v759 = vadd.s32 %v750, %v55
    %v760 = vadd.s32 %v750, %v56
    %v761 = vadd.s32 %v750, %v57
    %v762 = vadd.s32 %v750, %v58
    %v763 = vadd.s32 %v750, %v59
    %v764 = vadd.s32 %v750, %v60
    %v765 = vadd.s32 %v750, %v61
    %v766 = vadd.s32 %v750, %v62
    %vm767 = vcmp.lt.s32.totalorder %v751, 8
    %vm768 = vcmp.lt.s32.totalorder %v752, 8
    %vm769 = vcmp.lt.s32.totalorder %v753, 8
    %vm770 = vcmp.lt.s32.totalorder %v754, 8
    %vm771 = vcmp.lt.s32.totalorder %v755, 8
    %vm772 = vcmp.lt.s32.totalorder %v756, 8
    %vm773 = vcmp.lt.s32.totalorder %v757, 8
    %vm774 = vcmp.lt.s32.totalorder %v758, 8
    %vm775 = vcmp.lt.s32.totalorder %v759, 8
    %vm776 = vcmp.lt.s32.totalorder %v760, 8
    %vm777 = vcmp.lt.s32.totalorder %v761, 8
    %vm778 = vcmp.lt.s32.totalorder %v762, 8
    %vm779 = vcmp.lt.s32.totalorder %v763, 8
    %vm780 = vcmp.lt.s32.totalorder %v764, 8
    %vm781 = vcmp.lt.s32.totalorder %v765, 8
    %vm782 = vcmp.lt.s32.totalorder %v766, 8
    %v783 = vsel %vm767, %v733, 0.0
    %v784 = vsel %vm768, %v734, 0.0
    %v785 = vsel %vm769, %v735, 0.0
    %v786 = vsel %vm770, %v736, 0.0
    %v787 = vsel %vm771, %v737, 0.0
    %v788 = vsel %vm772, %v738, 0.0
    %v789 = vsel %vm773, %v739, 0.0
    %v790 = vsel %vm774, %v740, 0.0
    %v791 = vsel %vm775, %v741, 0.0
    %v792 = vsel %vm776, %v742, 0.0
    %v793 = vsel %vm777, %v743, 0.0
    %v794 = vsel %vm778, %v744, 0.0
    %v795 = vsel %vm779, %v745, 0.0
    %v796 = vsel %vm780, %v746, 0.0
    %v797 = vsel %vm781, %v747, 0.0
    %v798 = vsel %vm782, %v748, 0.0
    %vm799 = vcmask 7168
    %v800 = vsel %vm799, %v783, 0.0
    %v801 = vsel %vm799, %v784, 0.0
    %v802 = vadd.f32 %v800, %v801
    %v803 = vsel %vm799, %v785, 0.0
    %v804 = vadd.f32 %v802, %v803
    %v805 = vsel %vm799, %v786, 0.0
    %v806 = vadd.f32 %v804, %v805
    %v807 = vsel %vm799, %v787, 0.0
    %v808 = vadd.f32 %v806, %v807
    %v809 = vsel %vm799, %v788, 0.0
    %v810 = vadd.f32 %v808, %v809
    %v811 = vsel %vm799, %v789, 0.0
    %v812 = vadd.f32 %v810, %v811
    %v813 = vsel %vm799, %v790, 0.0
    %v814 = vadd.f32 %v812, %v813
    %v815 = vsel %vm799, %v791, 0.0
    %v816 = vadd.f32 %v814, %v815
    %v817 = vsel %vm799, %v792, 0.0
    %v818 = vadd.f32 %v816, %v817
    %v819 = vsel %vm799, %v793, 0.0
    %v820 = vadd.f32 %v818, %v819
    %v821 = vsel %vm799, %v794, 0.0
    %v822 = vadd.f32 %v820, %v821
    %v823 = vsel %vm799, %v795, 0.0
    %v824 = vadd.f32 %v822, %v823
    %v825 = vsel %vm799, %v796, 0.0
    %v826 = vadd.f32 %v824, %v825
    %v827 = vsel %vm799, %v797, 0.0
    %v828 = vadd.f32 %v826, %v827
    %v829 = vsel %vm799, %v798, 0.0
    %v830 = vadd.f32 %v828, %v829
    %831 = vadd.xlane.f32.xlu0 %v830
    %v832 = vpop.xlane.xlu0 %831
    %v833 = vrot.slane %v832, 4
    %v834 = vadd.f32 %v832, %v833
    %v835 = vrot.slane %v834, 2
    %v836 = vadd.f32 %v834, %v835
    %v837 = vrot.slane %v836, 1
    %v838 = vadd.f32 %v836, %v837
    %s839 = vtos %v838
    %vm840 = vcmp.eq.s32.totalorder %v64, 0
    %v841 = vstv %s839
    %v842 = vsel %vm840, %v841, 0.0
    %843 = vst [vmem:[#allocation5] sm:$0x1] %v842
    // Predicated region
    $region18: #{tpu_custom_call.1} parent=1 // pred_check
      _
    $region19: #{tpu_custom_call.1} parent=1 // pred_check_branch
      %845 = sbr.rel (0) target = $region21
    $region20: #{tpu_custom_call.1} parent=1 // pred_region
      %s847 = ssub.s32 16, 16
      %848 = vsyncadd [#allocation4], %s847
      %s850 = sshll.u32 [#allocation5], 4
      %s851 = int_to_ptr.vmem [resolvable:$true] %s850
      %853 = dma.vmem_to_hbm [thread:$0]  %s851, 16, %s3, [#allocation4]
    $region21: #{tpu_custom_call.1} parent=1 // pred_fallthru
      _
    // Predicated region
    $region22: #{tpu_custom_call.1} parent=1 // pred_check
      _
    $region23: #{tpu_custom_call.1} parent=1 // pred_check_branch
      %855 = sbr.rel (0) target = $region25
    $region24: #{tpu_custom_call.1} parent=1 // pred_region
      %856 = dma.done [#allocation4], 16
    $region25: #{tpu_custom_call.1} parent=1 // pred_fallthru
      _
    %857 = vsyncpa [#allocation3], 1
    %858 = vsyncpa [#allocation4], 1

</llo_original>
